<compile_context>
chip_gen: v7x
topology: tpu7x:2x2x1
jax: 0.10.0
libtpu: 0.0.40
codegen_flags: <defaults>
</compile_context>

<pallas_src>
import functools

import jax
import jax.numpy as jnp
from jax.experimental import pallas as pl
from jax.experimental.pallas import tpu as pltpu


# ----------------------------------------------------------------------------
# Generation-aware limits
# ----------------------------------------------------------------------------
def _tpu_vmem_bytes():
    """Physical VMEM per TensorCore; falls back to the smallest (v7x: 64 MiB)."""
    try:
        info = pltpu.get_tpu_info()
        for attr in ("vmem_capacity_bytes", "vmem_bytes", "vmem_size_bytes"):
            v = getattr(info, attr, None)
            if v:
                return int(v)
    except Exception:
        pass
    return 64 * 1024 * 1024


def _limits():
    vmem = _tpu_vmem_bytes()
    # Scoped-VMEM limit for the kernels: ~3/4 of physical, capped at 96 MiB.
    #   v5e/v6e (128 MiB) -> 96 MiB, v7x (64 MiB) -> 48 MiB.
    vmem_limit = min((vmem * 3) // 4, 96 * 1024 * 1024)
    # Fused-path block budget: x-in and out are each double-buffered (~4x one
    # block) plus weights/gate -> keep one block <= vmem_limit / 5.
    #   v5e/v6e -> ~19 MiB, v7x -> ~9.6 MiB.
    fused_block_budget = vmem_limit // 5
    return vmem_limit, fused_block_budget


# ----------------------------------------------------------------------------
# Kernels
# ----------------------------------------------------------------------------
def _excite_vpu(pooled, w1, w2):
    """Excitation MLP (Linear->ReLU->Linear->Sigmoid) on the VPU.

    pooled: (B, c) f32, lane-dense over c.
    w1:     (c_r, c) -- PyTorch-native Linear(c, c_r) weight (lane-dense in c).
    w2:     (c, c_r) -- PyTorch-native Linear(c_r, c) weight.
    Returns the gate as (B, c, 1) f32 with channels on the sublane axis, so the
    final x*gate scale is a plain VPU broadcast-multiply (no lane->sublane
    relayout per tile).
    """
    w1f = w1.astype(jnp.float32)
    w2f = w2.astype(jnp.float32)
    # Layer 1: lane reduce over c.
    h = jnp.sum(pooled[:, None, :] * w1f[None, :, :], axis=-1)            # (B, c_r)
    h = jnp.maximum(h, 0.0)
    # Layer 2: lane reduce over c_r; result lands channel-on-sublane.
    g = jnp.sum(h[:, None, :] * w2f[None, :, :], axis=-1, keepdims=True)  # (B, c, 1)
    return jax.nn.sigmoid(g)


def _se_fused_kernel(x_ref, w1_ref, w2_ref, o_ref, *, inv_hw):
    """B_blk batch elements per grid step; whole (B_blk, c, hw) slab resident."""
    # Squeeze: channel means over the lane (H*W) axis (f32 accumulation).
    pooled = jnp.sum(x_ref[...].astype(jnp.float32), axis=-1) * inv_hw    # (B, c)
    gate = _excite_vpu(pooled, w1_ref[...], w2_ref[...])                  # (B, c, 1)
    # Re-read x from the VMEM ref for the scale (keeps vreg pressure low).
    o_ref[...] = (x_ref[...].astype(jnp.float32) * gate).astype(o_ref.dtype)


def _pool_excite_kernel(x_ref, w1_ref, w2_ref, gate_ref, acc_ref, *, inv_hw):
    """Phase 1: accumulate channel sums over HW tiles, then excitation MLP."""
    t = pl.program_id(1)

    @pl.when(t == 0)
    def _():
        acc_ref[...] = jnp.zeros_like(acc_ref)

    # Partial channel sums for this HW tile (padded zeros contribute nothing).
    acc_ref[...] += jnp.sum(x_ref[...].astype(jnp.float32), axis=-1)      # (1, c)

    @pl.when(t == pl.num_programs(1) - 1)
    def _():
        pooled = acc_ref[...] * inv_hw                                    # (1, c)
        gate_ref[...] = _excite_vpu(pooled, w1_ref[...], w2_ref[...])     # (1, c, 1)


def _scale_kernel(x_ref, g_ref, o_ref):
    """Phase 2: apply the per-channel (sublane) gate to one lane-dense HW tile."""
    o_ref[...] = (x_ref[...].astype(jnp.float32) * g_ref[...]).astype(o_ref.dtype)


# ----------------------------------------------------------------------------
# Wrappers
# ----------------------------------------------------------------------------
def _pick_batch_block(bs, slab_bytes, block_budget):
    """Batch elements per fused grid step: hit ~1-4 MiB blocks, but keep the
    parallel grid axis >= 2 when bs >= 2 (v7x megacore utilization)."""
    target = min(block_budget, 4 * 1024 * 1024)
    cap = max(1, target // max(1, slab_bytes))
    if bs >= 2:
        cap = min(cap, bs // 2)
    cap = max(1, min(cap, bs))
    for b in range(cap, 0, -1):
        if bs % b == 0:
            return b
    return 1


def _pick_hw_tile(hw, c, itemsize, target_block_bytes):
    """Lane-dense (multiple-of-128) HW tile sized by a byte budget."""
    max_lanes = max(128, ((target_block_bytes // max(1, c * itemsize)) // 128) * 128)
    hw_128 = pl.cdiv(hw, 128) * 128
    if hw_128 <= max_lanes:
        return hw_128                      # single (possibly padded) tile
    if hw % 128 == 0:
        for t in range(max_lanes, 127, -128):
            if hw % t == 0:                # largest divisor -> no padding
                return t
    return max_lanes                       # caller pads hw up to a tile multiple


def _se_block_fused(x3, w1, w2, *, vmem_limit, block_budget):
    bs, c, hw = x3.shape
    slab_bytes = c * hw * x3.dtype.itemsize
    b_blk = _pick_batch_block(bs, slab_bytes, block_budget)
    kernel = functools.partial(_se_fused_kernel, inv_hw=1.0 / hw)
    return pl.pallas_call(
        kernel,
        out_shape=jax.ShapeDtypeStruct((bs, c, hw), x3.dtype),
        grid=(bs // b_blk,),
        in_specs=[
            pl.BlockSpec((b_blk, c, hw), lambda b: (b, 0, 0)),
            pl.BlockSpec(w1.shape, lambda b: (0, 0)),
            pl.BlockSpec(w2.shape, lambda b: (0, 0)),
        ],
        out_specs=pl.BlockSpec((b_blk, c, hw), lambda b: (b, 0, 0)),
        compiler_params=pltpu.CompilerParams(
            dimension_semantics=("parallel",),
            vmem_limit_bytes=vmem_limit,
        ),
    )(x3, w1, w2)


def _se_block_two_phase(x3, w1, w2, *, hw_tile, vmem_limit, target_block_bytes):
    bs, c, hw = x3.shape
    itemsize = x3.dtype.itemsize
    if hw_tile is None:
        hw_tile = _pick_hw_tile(hw, c, itemsize, target_block_bytes)
    # Pad H*W so every tile is full and lane-dense; padded zeros contribute
    # nothing to the channel sums (mean divides by the true hw) and padded
    # outputs are sliced away below.
    hw_pad = ((hw + hw_tile - 1) // hw_tile) * hw_tile
    x_work = x3 if hw_pad == hw else jnp.pad(
        x3, ((0, 0), (0, 0), (0, hw_pad - hw)))
    n_t = hw_pad // hw_tile

    # Phase 1: squeeze (tiled channel sums) + excitation MLP -> gate (bs, c, 1).
    pool_kernel = functools.partial(_pool_excite_kernel, inv_hw=1.0 / hw)
    gate = pl.pallas_call(
        pool_kernel,
        out_shape=jax.ShapeDtypeStruct((bs, c, 1), jnp.float32),
        grid=(bs, n_t),
        in_specs=[
            pl.BlockSpec((1, c, hw_tile), lambda b, t: (b, 0, t)),
            pl.BlockSpec(w1.shape, lambda b, t: (0, 0)),
            pl.BlockSpec(w2.shape, lambda b, t: (0, 0)),
        ],
        out_specs=pl.BlockSpec((1, c, 1), lambda b, t: (b, 0, 0)),
        scratch_shapes=[pltpu.VMEM((1, c), jnp.float32)],
        compiler_params=pltpu.CompilerParams(
            dimension_semantics=("parallel", "arbitrary"),
            vmem_limit_bytes=vmem_limit,
        ),
    )(x_work, w1, w2)

    # Phase 2: broadcast the channel-on-sublane gate over every HW tile.
    out3 = pl.pallas_call(
        _scale_kernel,
        out_shape=jax.ShapeDtypeStruct((bs, c, hw_pad), x3.dtype),
        grid=(bs, n_t),
        in_specs=[
            pl.BlockSpec((1, c, hw_tile), lambda b, t: (b, 0, t)),
            pl.BlockSpec((1, c, 1), lambda b, t: (b, 0, 0)),
        ],
        out_specs=pl.BlockSpec((1, c, hw_tile), lambda b, t: (b, 0, t)),
        compiler_params=pltpu.CompilerParams(
            dimension_semantics=("parallel", "parallel"),
            vmem_limit_bytes=vmem_limit,
        ),
    )(x_work, gate)

    if hw_pad != hw:
        out3 = out3[:, :, :hw]
    return out3


def se_block(x_nchw, w1, w2, *, force_two_phase=False, hw_tile=None):
    """SE-block forward.

    x_nchw: (bs, c, H, W).
    w1: (c//r, c), w2: (c, c//r)  -- PyTorch nn.Linear native weight layouts.
    Returns the same shape/dtype as x_nchw.
    """
    bs, c, H, W = x_nchw.shape
    hw = H * W
    x3 = x_nchw.reshape(bs, c, hw)             # contiguous view of NCHW

    vmem_limit, fused_block_budget = _limits()
    slab_bytes = c * hw * x_nchw.dtype.itemsize

    if (not force_two_phase) and slab_bytes <= fused_block_budget:
        out3 = _se_block_fused(x3, w1, w2, vmem_limit=vmem_limit,
                               block_budget=fused_block_budget)
    else:
        target = min(4 * 1024 * 1024, vmem_limit // 8)
        out3 = _se_block_two_phase(x3, w1, w2, hw_tile=hw_tile,
                                   vmem_limit=vmem_limit,
                                   target_block_bytes=target)
    return out3.reshape(bs, c, H, W)


def se_block_ref(x, w1, w2):
    """Pure-JAX reference matching the PyTorch forward (native weight layouts)."""
    y = jnp.mean(x, axis=(2, 3))                 # AdaptiveAvgPool2d(1) + view
    y = jnp.maximum(y @ w1.T, 0.0)               # Linear(c, c//r) + ReLU
    y = jax.nn.sigmoid(y @ w2.T)                 # Linear(c//r, c) + Sigmoid
    return x * y[:, :, None, None]


if __name__ == "__main__":
    bs, c, H, W = 2, 32, 16, 16   # c=32 with r=16 -> hidden = 2
    r = 16
    c_r = c // r

    key = jax.random.PRNGKey(0)
    kx, k1, k2, kx2 = jax.random.split(key, 4)

    x = jax.random.normal(kx, (bs, c, H, W), dtype=jnp.float32)
    # PyTorch-native nn.Linear weight layouts: w1=(c_r, c), w2=(c, c_r).
    w1 = jax.random.normal(k1, (c_r, c), dtype=jnp.float32) * (1.0 / c ** 0.5)
    w2 = jax.random.normal(k2, (c, c_r), dtype=jnp.float32) * (1.0 / c_r ** 0.5)

    ref = se_block_ref(x, w1, w2)

    # Fast fused path (grid over batch blocks, whole per-block slab in VMEM).
    out_fused = jax.block_until_ready(se_block(x, w1, w2))
    assert out_fused.shape == (bs, c, H, W)
    assert jnp.allclose(out_fused, ref, atol=1e-5, rtol=1e-5), "fused mismatch"

    # General tiled two-phase path, forced with hw_tile=128 so the cross-tile
    # accumulation is exercised as well.
    out_tiled = jax.block_until_ready(
        se_block(x, w1, w2, force_two_phase=True, hw_tile=128))
    assert out_tiled.shape == (bs, c, H, W)
    assert jnp.allclose(out_tiled, ref, atol=1e-5, rtol=1e-5), "tiled mismatch"

    # Non-128-multiple spatial size (7x7, as in real SE-ResNets): exercises the
    # zero-padded lane-dense two-phase path.
    x2 = jax.random.normal(kx2, (bs, c, 7, 7), dtype=jnp.float32)
    ref2 = se_block_ref(x2, w1, w2)
    out2 = jax.block_until_ready(se_block(x2, w1, w2, force_two_phase=True))
    assert out2.shape == (bs, c, 7, 7)
    assert jnp.allclose(out2, ref2, atol=1e-5, rtol=1e-5), "padded mismatch"

    print("KERNEL_OK")
</pallas_src>

<mosaic_0001>
module attributes {stable_mosaic.version = 11 : i64} {
  func.func @_se_fused_kernel(%arg0: i32, %arg1: memref<1x32x256xf32, #tpu.memory_space<vmem>>, %arg2: memref<2x32xf32, #tpu.memory_space<vmem>>, %arg3: memref<32x2xf32, #tpu.memory_space<vmem>>, %arg4: memref<1x32x256xf32, #tpu.memory_space<vmem>>) attributes {dimension_semantics = [#tpu.dimension_semantics<parallel>], iteration_bounds = array<i64: 2>, scalar_prefetch = 0 : i64, scratch_operands = 0 : i64, tpu.core_type = #tpu.core_type<tc>, window_params = [{transform_indices = @transform_0, window_bounds = array<i64: 1, 32, 256>}, {pipeline_mode = #tpu.pipeline_mode<synchronous>, transform_indices = @transform_1, window_bounds = array<i64: 2, 32>}, {pipeline_mode = #tpu.pipeline_mode<synchronous>, transform_indices = @transform_2, window_bounds = array<i64: 32, 2>}, {transform_indices = @transform_3, window_bounds = array<i64: 1, 32, 256>}]} {
    %c0 = arith.constant 0 : index
    %c0_0 = arith.constant 0 : index
    %c0_1 = arith.constant 0 : index
    %0 = vector.load %arg1[%c0, %c0_0, %c0_1] : memref<1x32x256xf32, #tpu.memory_space<vmem>>, vector<1x32x256xf32>
    %cst = arith.constant dense<0.000000e+00> : vector<1x32xf32>
    %1 = vector.multi_reduction <add>, %0, %cst [2] : vector<1x32x256xf32> to vector<1x32xf32>
    %cst_2 = arith.constant 3.906250e-03 : f32
    %2 = vector.broadcast %cst_2 : f32 to vector<1x32xf32>
    %3 = arith.mulf %1, %2 : vector<1x32xf32>
    %c0_3 = arith.constant 0 : index
    %c0_4 = arith.constant 0 : index
    %4 = vector.load %arg2[%c0_3, %c0_4] : memref<2x32xf32, #tpu.memory_space<vmem>>, vector<2x32xf32>
    %c0_5 = arith.constant 0 : index
    %c0_6 = arith.constant 0 : index
    %5 = vector.load %arg3[%c0_5, %c0_6] : memref<32x2xf32, #tpu.memory_space<vmem>>, vector<32x2xf32>
    %6 = vector.shape_cast %3 : vector<1x32xf32> to vector<1x1x32xf32>
    %7 = vector.shape_cast %4 : vector<2x32xf32> to vector<1x2x32xf32>
    %8 = vector.broadcast %6 : vector<1x1x32xf32> to vector<1x2x32xf32>
    %9 = arith.mulf %8, %7 : vector<1x2x32xf32>
    %cst_7 = arith.constant dense<0.000000e+00> : vector<1x2xf32>
    %10 = vector.multi_reduction <add>, %9, %cst_7 [2] : vector<1x2x32xf32> to vector<1x2xf32>
    %cst_8 = arith.constant 0.000000e+00 : f32
    %11 = vector.broadcast %cst_8 : f32 to vector<1x2xf32>
    %12 = arith.maximumf %10, %11 : vector<1x2xf32>
    %13 = vector.shape_cast %12 : vector<1x2xf32> to vector<1x1x2xf32>
    %14 = vector.shape_cast %5 : vector<32x2xf32> to vector<1x32x2xf32>
    %15 = vector.broadcast %13 : vector<1x1x2xf32> to vector<1x32x2xf32>
    %16 = arith.mulf %15, %14 : vector<1x32x2xf32>
    %cst_9 = arith.constant dense<0.000000e+00> : vector<1x32xf32>
    %17 = vector.multi_reduction <add>, %16, %cst_9 [2] : vector<1x32x2xf32> to vector<1x32xf32>
    %18 = vector.shape_cast %17 : vector<1x32xf32> to vector<1x32x1xf32>
    %19 = arith.negf %18 : vector<1x32x1xf32>
    %20 = math.exp %19 : vector<1x32x1xf32>
    %cst_10 = arith.constant 1.000000e+00 : f32
    %21 = vector.broadcast %cst_10 : f32 to vector<1x32x1xf32>
    %22 = arith.addf %21, %20 : vector<1x32x1xf32>
    %23 = arith.divf %21, %22 : vector<1x32x1xf32>
    %c0_11 = arith.constant 0 : index
    %c0_12 = arith.constant 0 : index
    %c0_13 = arith.constant 0 : index
    %24 = vector.load %arg1[%c0_11, %c0_12, %c0_13] : memref<1x32x256xf32, #tpu.memory_space<vmem>>, vector<1x32x256xf32>
    %25 = vector.broadcast %23 : vector<1x32x1xf32> to vector<1x32x256xf32>
    %26 = arith.mulf %24, %25 : vector<1x32x256xf32>
    %c0_14 = arith.constant 0 : index
    %c0_15 = arith.constant 0 : index
    %c0_16 = arith.constant 0 : index
    %27 = vector.load %arg4[%c0_14, %c0_15, %c0_16] : memref<1x32x256xf32, #tpu.memory_space<vmem>>, vector<1x32x256xf32>
    tpu.vector_store %arg4[%c0_14, %c0_15, %c0_16], %26 {strides = array<i32>} : memref<1x32x256xf32, #tpu.memory_space<vmem>>, vector<1x32x256xf32>,
    return
  }
  func.func @transform_0(%arg0: i32) -> (i32, i32, i32) {
    %c0_i32 = arith.constant 0 : i32
    %c0_i32_0 = arith.constant 0 : i32
    %c0_i32_1 = arith.constant 0 : i32
    return %arg0, %c0_i32, %c0_i32_0 : i32, i32, i32
  }
  func.func @transform_1(%arg0: i32) -> (i32, i32) {
    %c0_i32 = arith.constant 0 : i32
    %c0_i32_0 = arith.constant 0 : i32
    %c0_i32_1 = arith.constant 0 : i32
    return %c0_i32, %c0_i32_0 : i32, i32
  }
  func.func @transform_2(%arg0: i32) -> (i32, i32) {
    %c0_i32 = arith.constant 0 : i32
    %c0_i32_0 = arith.constant 0 : i32
    %c0_i32_1 = arith.constant 0 : i32
    return %c0_i32, %c0_i32_0 : i32, i32
  }
  func.func @transform_3(%arg0: i32) -> (i32, i32, i32) {
    %c0_i32 = arith.constant 0 : i32
    %c0_i32_0 = arith.constant 0 : i32
    %c0_i32_1 = arith.constant 0 : i32
    return %arg0, %c0_i32, %c0_i32_0 : i32, i32, i32
  }
}

</mosaic_0001>

<llo_original>
// kernel: tpu_custom_call.1
$region0: #{tpu_custom_call.1}
  #allocation0 [shape = 'u32[]', space=smem, size = 0x4, offset = 0x4, fixed_abs, tag = 'smem constant byte address 0x4 - core index']
  #allocation1 [shape = 'u32[144,128]{1,0:T(1,128)}', space=vmem, size = 0x12000, scoped, tag = 'internal scratch']
  %s0 = inlined_call_operand.hbm [shape: f32[2,32,256], index: 0, kind: input, shape index: {}]
  %s1 = inlined_call_operand.vmem [shape: f32[2,32], index: 1, kind: input, shape index: {}]
  %s2 = inlined_call_operand.vmem [shape: f32[32,2], index: 2, kind: input, shape index: {}]
  %s3 = inlined_call_operand.hbm [shape: f32[2,32,256], index: 3, kind: output, shape index: {}]
  %s4 = sld [smem:[#allocation0]]
  $region49: #{tpu_custom_call.1} parent=0
    _
  %s6 = ssub.s32 1, %s4
  %s7 = scalar_select 0, %s6, %s4
  $region1: #{tpu_custom_call.1} parent=0
    #allocation2 [shape = 'u8[65536]{0}', space=vmem, size = 0x10000, scoped, tag = 'input window, operand 0']
    #allocation3 [shape = 's32[2]{0}', space=sflag, size = 0x8, scoped, tag = 'scoped memory for tpu_custom_call.1']
    #allocation4 [shape = 's32[2]{0}', space=sflag, size = 0x8, scoped, tag = 'scoped memory for tpu_custom_call.1']
    #allocation5 [shape = 'u8[65536]{0}', space=vmem, size = 0x10000, scoped, tag = 'output window, operand 0']
    %8 = vsyncpa [#allocation3], 0
    %s9 = scalar_lea.sflag [#allocation3], 1
    %10 = vsyncpa %s9, 0
    %11 = vsyncpa [#allocation4], 0
    %s12 = scalar_lea.sflag [#allocation4], 1
    %13 = vsyncpa %s12, 0
    loop: start=0, step=1, limit=4
    $region2: #{tpu_custom_call.1} parent=1 // loop_pre_header
      _
    $region3: #{tpu_custom_call.1} parent=1 // loop_header
      %s15 = sphi 0, %s19
      %p16 = scmp.ge.s32.totalorder %s15, 4
      %s25 = sphi 0, %s27
      %s28 = sphi 0, %s25
      %s29 = sphi 0, %s28
      %s45 = sphi 0, %s29
      %s49 = sphi 0, %s49
      %s51 = sphi 0, %s49
      %s52 = sphi 0, %s51
      %s66 = sphi 0, %s52
      %s70 = sphi 0, %s70
      %s72 = sphi 0, %s70
      %s73 = sphi 0, %s72
      %s87 = sphi 0, %s73
      %s93 = sphi 0, %s95
      %s96 = sphi 0, %s93
      %s97 = sphi 0, %s96
      %s113 = sphi 0, %s97
    $region4: #{tpu_custom_call.1} parent=1 // loop_header_branch
      %18 = sbr.rel (%p16) target = $region8
    $region5: #{tpu_custom_call.1} parent=1 // loop_body
      %s20 = ssub.s32 %s15, 1
      %s21 = ssub.s32 %s15, 2
      %s22 = sadd.s32 %s15, 1
      %s23 = ssub.s32 %s15, %s22
      %p24 = scmp.eq.s32.totalorder %s23, 0
      %s26 = sadd.s32 %s25, 1
      %s27 = scalar_select %p24, %s25, %s26
      %p30 = pneg %p24
      %p31 = scmp.eq.s32.totalorder %s15, 1
      %p32 = por %p30, %p31
      %p33 = scmp.ne.s32.totalorder %s25, %s28
      %p34 = scmp.eq.s32.totalorder %s15, 0
      %p35 = por %p33, %p34
      %p36 = scmp.ne.s32.totalorder %s25, %s28
      %p37 = scmp.eq.s32.totalorder %s20, 1
      %p38 = por %p36, %p37
      %p39 = scmp.ne.s32.totalorder %s28, %s29
      %p40 = scmp.eq.s32.totalorder %s20, 0
      %p41 = por %p39, %p40
      %p42 = scmp.ne.s32.totalorder %s28, %s29
      %p43 = scmp.eq.s32.totalorder %s21, 1
      %p44 = por %p42, %p43
      %p46 = scmp.ne.s32.totalorder %s29, %s45
      %p47 = scmp.eq.s32.totalorder %s21, 0
      %p48 = por %p46, %p47
      %s50 = sadd.s32 %s49, 1
      %p53 = scmp.eq.s32.totalorder %s15, 1
      %p54 = scmp.ne.s32.totalorder %s49, %s51
      %p55 = scmp.eq.s32.totalorder %s15, 0
      %p56 = por %p54, %p55
      %p57 = scmp.ne.s32.totalorder %s49, %s51
      %p58 = scmp.eq.s32.totalorder %s20, 1
      %p59 = por %p57, %p58
      %p60 = scmp.ne.s32.totalorder %s51, %s52
      %p61 = scmp.eq.s32.totalorder %s20, 0
      %p62 = por %p60, %p61
      %p63 = scmp.ne.s32.totalorder %s51, %s52
      %p64 = scmp.eq.s32.totalorder %s21, 1
      %p65 = por %p63, %p64
      %p67 = scmp.ne.s32.totalorder %s52, %s66
      %p68 = scmp.eq.s32.totalorder %s21, 0
      %p69 = por %p67, %p68
      %s71 = sadd.s32 %s70, 1
      %p74 = scmp.eq.s32.totalorder %s15, 1
      %p75 = scmp.ne.s32.totalorder %s70, %s72
      %p76 = scmp.eq.s32.totalorder %s15, 0
      %p77 = por %p75, %p76
      %p78 = scmp.ne.s32.totalorder %s70, %s72
      %p79 = scmp.eq.s32.totalorder %s20, 1
      %p80 = por %p78, %p79
      %p81 = scmp.ne.s32.totalorder %s72, %s73
      %p82 = scmp.eq.s32.totalorder %s20, 0
      %p83 = por %p81, %p82
      %p84 = scmp.ne.s32.totalorder %s72, %s73
      %p85 = scmp.eq.s32.totalorder %s21, 1
      %p86 = por %p84, %p85
      %p88 = scmp.ne.s32.totalorder %s73, %s87
      %p89 = scmp.eq.s32.totalorder %s21, 0
      %p90 = por %p88, %p89
      %s91 = ssub.s32 %s15, %s22
      %p92 = scmp.eq.s32.totalorder %s91, 0
      %s94 = sadd.s32 %s93, 1
      %s95 = scalar_select %p92, %s93, %s94
      %p98 = pneg %p92
      %p99 = scmp.eq.s32.totalorder %s15, 1
      %p100 = por %p98, %p99
      %p101 = scmp.ne.s32.totalorder %s93, %s96
      %p102 = scmp.eq.s32.totalorder %s15, 0
      %p103 = por %p101, %p102
      %p104 = scmp.ne.s32.totalorder %s93, %s96
      %p105 = scmp.eq.s32.totalorder %s20, 1
      %p106 = por %p104, %p105
      %p107 = scmp.ne.s32.totalorder %s96, %s97
      %p108 = scmp.eq.s32.totalorder %s20, 0
      %p109 = por %p107, %p108
      %p110 = scmp.ne.s32.totalorder %s96, %s97
      %p111 = scmp.eq.s32.totalorder %s21, 1
      %p112 = por %p110, %p111
      %p114 = scmp.ne.s32.totalorder %s97, %s113
      %p115 = scmp.eq.s32.totalorder %s21, 0
      %p116 = por %p114, %p115
      %p117 = scmp.le.s32.totalorder 1, %s15
      %p118 = scmp.lt.s32.totalorder %s15, 3
      %p119 = pnand %p117, %p118
      %p120 = pneg %p119
      // Predicated region
      $region9: #{tpu_custom_call.1} parent=5 // pred_check
        _
      $region10: #{tpu_custom_call.1} parent=5 // pred_check_branch
        %122 = sbr.rel (%p119) target = $region12
      $region11: #{tpu_custom_call.1} parent=5 // pred_region
        %s123 = ssub.s32 %s15, 1
        // Predicated region
        $region13: #{tpu_custom_call.1} parent=11 // pred_check
          %p124 = pneg %p62
        $region14: #{tpu_custom_call.1} parent=11 // pred_check_branch
          %126 = sbr.rel (%p124) target = $region16
        $region15: #{tpu_custom_call.1} parent=11 // pred_region
          _
        $region16: #{tpu_custom_call.1} parent=11 // pred_fallthru
          _
        // Predicated region
        $region17: #{tpu_custom_call.1} parent=11 // pred_check
          %p127 = pneg %p83
        $region18: #{tpu_custom_call.1} parent=11 // pred_check_branch
          %129 = sbr.rel (%p127) target = $region20
        $region19: #{tpu_custom_call.1} parent=11 // pred_region
          _
        $region20: #{tpu_custom_call.1} parent=11 // pred_fallthru
          _
      $region12: #{tpu_custom_call.1} parent=5 // pred_fallthru
        _
      %p130 = scmp.lt.s32.totalorder %s15, 2
      // Predicated region
      $region21: #{tpu_custom_call.1} parent=5 // pred_check
        %p131 = pneg %p130
      $region22: #{tpu_custom_call.1} parent=5 // pred_check_branch
        %133 = sbr.rel (%p131) target = $region24
      $region23: #{tpu_custom_call.1} parent=5 // pred_region
        // Predicated region
        $region25: #{tpu_custom_call.1} parent=23 // pred_check
          %p134 = pneg %p35
        $region26: #{tpu_custom_call.1} parent=23 // pred_check_branch
          %136 = sbr.rel (%p134) target = $region28
        $region27: #{tpu_custom_call.1} parent=23 // pred_region
          %s137 = sand.u32 %s25, 1
          %s138 = scalar_lea.sflag [#allocation3], %s137
          %s139 = sand.u32 %s25, 1
          %s140 = smul.addr %s139, 64
          %s141 = scalar_lea.vmem [#allocation2], %s140
          %s143 = ssub.s32 1024, 1024
          %144 = vsyncadd %s138, %s143
          %s145 = smul.addr %s15, 8
          %s146 = smul.addr %s145, 128
          %s147 = scalar_lea.hbm %s0, %s146
          %s148 = sshll.u32 %s141, 4
          %s149 = int_to_ptr.vmem [resolvable:$true] %s148
          %154 = dma.hbm_to_vmem [thread:$0]  %s147, 1024, %s149, %s138, 256, 256, 16
        $region28: #{tpu_custom_call.1} parent=23 // pred_fallthru
          _
      $region24: #{tpu_custom_call.1} parent=5 // pred_fallthru
        _
      %p155 = scmp.le.s32.totalorder 1, %s15
      %p156 = scmp.lt.s32.totalorder %s15, 3
      %p157 = pnand %p155, %p156
      %p158 = pneg %p157
      // Predicated region
      $region29: #{tpu_custom_call.1} parent=5 // pred_check
        _
      $region30: #{tpu_custom_call.1} parent=5 // pred_check_branch
        %160 = sbr.rel (%p157) target = $region32
      $region31: #{tpu_custom_call.1} parent=5 // pred_region
        %s161 = ssub.s32 %s15, 1
        %s162 = sand.u32 %s28, 1
        %s163 = scalar_lea.sflag [#allocation3], %s162
        %s164 = sand.u32 %s28, 1
        %s165 = smul.addr %s164, 64
        %s166 = scalar_lea.vmem [#allocation2], %s165
        // Predicated region
        $region33: #{tpu_custom_call.1} parent=31 // pred_check
          %p167 = pneg %p41
        $region34: #{tpu_custom_call.1} parent=31 // pred_check_branch
          %169 = sbr.rel (%p167) target = $region36
        $region35: #{tpu_custom_call.1} parent=31 // pred_region
          %170 = dma.done %s163, 1024
        $region36: #{tpu_custom_call.1} parent=31 // pred_fallthru
          _
        %s171 = sand.u32 %s28, 1
        %s172 = scalar_lea.sflag [#allocation3], %s171
        %s173 = sand.u32 %s28, 1
        %s174 = smul.addr %s173, 64
        %s175 = scalar_lea.vmem [#allocation2], %s174
        %p176 = pneg %p41
        %p177 = pneg %p38
        %p178 = pneg %p62
        %p179 = pneg %p59
        %p180 = pneg %p83
        %p181 = pneg %p80
        %p182 = pneg %p109
        %p183 = pneg %p106
        %s184 = sand.u32 %s96, 1
        %s185 = scalar_lea.sflag [#allocation4], %s184
        %s186 = sand.u32 %s96, 1
        %s187 = smul.addr %s186, 64
        %s188 = scalar_lea.vmem [#allocation5], %s187
        %v189 = vld [vmem:[%s166] sm:$0xff]
        %v190 = vld [vmem:[%s166 + $0x8] sm:$0xff]
        %v191 = vld [vmem:[%s166 + $0x10] sm:$0xff]
        %v192 = vld [vmem:[%s166 + $0x18] sm:$0xff]
        %v193 = vld [vmem:[%s166 + $0x20] sm:$0xff]
        %v194 = vld [vmem:[%s166 + $0x28] sm:$0xff]
        %v195 = vld [vmem:[%s166 + $0x30] sm:$0xff]
        %v196 = vld [vmem:[%s166 + $0x38] sm:$0xff]
        %v197 = vadd.f32 %v189, %v190
        %198 = vadd.xlane.f32.xlu0 %v197
        %v199 = vpop.xlane.xlu0 %198
        %v200 = vadd.f32 %v191, %v192
        %201 = vadd.xlane.f32.xlu0 %v200
        %v202 = vpop.xlane.xlu0 %201
        %v203 = vadd.f32 %v193, %v194
        %204 = vadd.xlane.f32.xlu0 %v203
        %v205 = vpop.xlane.xlu0 %204
        %v206 = vadd.f32 %v195, %v196
        %207 = vadd.xlane.f32.xlu0 %v206
        %v208 = vpop.xlane.xlu0 %207
        %v209 = vmul.f32 %v199, 0.00390625
        %v210 = vmul.f32 %v202, 0.00390625
        %v211 = vmul.f32 %v205, 0.00390625
        %v212 = vmul.f32 %v208, 0.00390625
        %v213 = vld [vmem:[%s1] sm:$0x3]
        %v214 = vld [vmem:[%s2] sm:$0xff]
        %v215 = vld [vmem:[%s2 + $0x8] sm:$0xff]
        %v216 = vld [vmem:[%s2 + $0x10] sm:$0xff]
        %v217 = vld [vmem:[%s2 + $0x18] sm:$0xff]
        %v219 = vlaneseq
        %v220 = vshrl.u32 %v219, 7
        %v221 = vsub.s32 0, %v220
        %v222 = vrot.slane %v213, %v221
        %224 = vbcast.lane.b32.xlu0 %v222, 256
        %v225 = vpop.permute.xlu0 %224
        %s227 = sor.u32 256, 8
        %228 = vbcast.lane.b32.xlu0 %v222, %s227
        %v229 = vpop.permute.xlu0 %228
        %s231 = sor.u32 256, 16
        %232 = vbcast.lane.b32.xlu0 %v222, %s231
        %v233 = vpop.permute.xlu0 %232
        %s235 = sor.u32 256, 24
        %236 = vbcast.lane.b32.xlu0 %v222, %s235
        %v237 = vpop.permute.xlu0 %236
        %v238 = vlaneseq
        %v239 = vshrl.u32 %v238, 7
        %v240 = vsub.s32 1, %v239
        %v241 = vrot.slane %v213, %v240
        %243 = vbcast.lane.b32.xlu0 %v241, 256
        %v244 = vpop.permute.xlu0 %243
        %s246 = sor.u32 256, 8
        %247 = vbcast.lane.b32.xlu0 %v241, %s246
        %v248 = vpop.permute.xlu0 %247
        %s250 = sor.u32 256, 16
        %251 = vbcast.lane.b32.xlu0 %v241, %s250
        %v252 = vpop.permute.xlu0 %251
        %s254 = sor.u32 256, 24
        %255 = vbcast.lane.b32.xlu0 %v241, %s254
        %v256 = vpop.permute.xlu0 %255
        %v265 = vmul.f32 %v209, %v225
        %v266 = vmul.f32 %v210, %v229
        %v267 = vmul.f32 %v211, %v233
        %v268 = vmul.f32 %v212, %v237
        %v269 = vmul.f32 %v209, %v244
        %v270 = vmul.f32 %v210, %v248
        %v271 = vmul.f32 %v211, %v252
        %v272 = vmul.f32 %v212, %v256
        %281 = vset.pattern.permute.xlu0 0
        %282 = vperm.xlu0 %281, %v265
        %v283 = vpop.permute.xlu0 %282
        %284 = vset.pattern.permute.xlu0 0
        %285 = vperm.xlu0 %284, %v266
        %v286 = vpop.permute.xlu0 %285
        %287 = vset.pattern.permute.xlu0 0
        %288 = vperm.xlu0 %287, %v267
        %v289 = vpop.permute.xlu0 %288
        %290 = vset.pattern.permute.xlu0 0
        %291 = vperm.xlu0 %290, %v268
        %v292 = vpop.permute.xlu0 %291
        %293 = vset.pattern.permute.xlu0 0
        %294 = vperm.xlu0 %293, %v269
        %v295 = vpop.permute.xlu0 %294
        %296 = vset.pattern.permute.xlu0 0
        %297 = vperm.xlu0 %296, %v270
        %v298 = vpop.permute.xlu0 %297
        %299 = vset.pattern.permute.xlu0 0
        %300 = vperm.xlu0 %299, %v271
        %v301 = vpop.permute.xlu0 %300
        %302 = vset.pattern.permute.xlu0 0
        %303 = vperm.xlu0 %302, %v272
        %v304 = vpop.permute.xlu0 %303
        %v305 = vlaneseq
        %v306 = vand.u32 %v305, 127
        %v307 = vlaneseq
        %v308 = vshrl.u32 %v307, 7
        %v309 = vsub.s32 %v306, %v308
        %v310 = vrot.slane %v283, %v309
        %v311 = vadd.s32 %v306, 4294967288
        %v312 = vlaneseq
        %v313 = vshrl.u32 %v312, 7
        %v314 = vsub.s32 %v311, %v313
        %v315 = vrot.slane %v286, %v314
        %vm316 = vcmask 130112
        %v317 = vsel %vm316, %v315, %v310
        %v318 = vadd.s32 %v306, 4294967280
        %v319 = vlaneseq
        %v320 = vshrl.u32 %v319, 7
        %v321 = vsub.s32 %v318, %v320
        %v322 = vrot.slane %v289, %v321
        %vm323 = vcmask 195712
        %v324 = vsel %vm323, %v322, %v317
        %v325 = vadd.s32 %v306, 4294967272
        %v326 = vlaneseq
        %v327 = vshrl.u32 %v326, 7
        %v328 = vsub.s32 %v325, %v327
        %v329 = vrot.slane %v292, %v328
        %vm330 = vcmask 261312
        %v331 = vsel %vm330, %v329, %v324
        %v332 = vlaneseq
        %v333 = vshrl.u32 %v332, 7
        %v334 = vsub.s32 %v306, %v333
        %v335 = vrot.slane %v295, %v334
        %v336 = vlaneseq
        %v337 = vshrl.u32 %v336, 7
        %v338 = vsub.s32 %v311, %v337
        %v339 = vrot.slane %v298, %v338
        %v340 = vsel %vm316, %v339, %v335
        %v341 = vlaneseq
        %v342 = vshrl.u32 %v341, 7
        %v343 = vsub.s32 %v318, %v342
        %v344 = vrot.slane %v301, %v343
        %v345 = vsel %vm323, %v344, %v340
        %v346 = vlaneseq
        %v347 = vshrl.u32 %v346, 7
        %v348 = vsub.s32 %v325, %v347
        %v349 = vrot.slane %v304, %v348
        %v350 = vsel %vm330, %v349, %v345
        %vm351 = vcmask 1041409
        %v352 = vsel %vm351, %v350, %v331
        %vm354 = vcmask 254976
        %v355 = vsel %vm354, %v352, 0.0
        %356 = vadd.xlane.f32.xlu0 %v355
        %v357 = vpop.xlane.xlu0 %356
        %v358 = vmax.f32 %v357, 0.0
        %v363 = vlaneseq
        %v364 = vshrl.u32 %v363, 7
        %v365 = vsub.s32 0, %v364
        %v366 = vrot.slane %v214, %v365
        %368 = vbcast.lane.b32.xlu0 %v366, 256
        %v369 = vpop.permute.xlu0 %368
        %v370 = vlaneseq
        %v371 = vshrl.u32 %v370, 7
        %v372 = vsub.s32 1, %v371
        %v373 = vrot.slane %v214, %v372
        %375 = vbcast.lane.b32.xlu0 %v373, 256
        %v376 = vpop.permute.xlu0 %375
        %v377 = vlaneseq
        %v378 = vshrl.u32 %v377, 7
        %v379 = vsub.s32 2, %v378
        %v380 = vrot.slane %v214, %v379
        %382 = vbcast.lane.b32.xlu0 %v380, 256
        %v383 = vpop.permute.xlu0 %382
        %v384 = vlaneseq
        %v385 = vshrl.u32 %v384, 7
        %v386 = vsub.s32 3, %v385
        %v387 = vrot.slane %v214, %v386
        %389 = vbcast.lane.b32.xlu0 %v387, 256
        %v390 = vpop.permute.xlu0 %389
        %v391 = vlaneseq
        %v392 = vshrl.u32 %v391, 7
        %v393 = vsub.s32 4, %v392
        %v394 = vrot.slane %v214, %v393
        %396 = vbcast.lane.b32.xlu0 %v394, 256
        %v397 = vpop.permute.xlu0 %396
        %v398 = vlaneseq
        %v399 = vshrl.u32 %v398, 7
        %v400 = vsub.s32 5, %v399
        %v401 = vrot.slane %v214, %v400
        %403 = vbcast.lane.b32.xlu0 %v401, 256
        %v404 = vpop.permute.xlu0 %403
        %v405 = vlaneseq
        %v406 = vshrl.u32 %v405, 7
        %v407 = vsub.s32 6, %v406
        %v408 = vrot.slane %v214, %v407
        %410 = vbcast.lane.b32.xlu0 %v408, 256
        %v411 = vpop.permute.xlu0 %410
        %v412 = vlaneseq
        %v413 = vshrl.u32 %v412, 7
        %v414 = vsub.s32 7, %v413
        %v415 = vrot.slane %v214, %v414
        %417 = vbcast.lane.b32.xlu0 %v415, 256
        %v418 = vpop.permute.xlu0 %417
        %v419 = vlaneseq
        %v420 = vshrl.u32 %v419, 7
        %v421 = vsub.s32 0, %v420
        %v422 = vrot.slane %v215, %v421
        %424 = vbcast.lane.b32.xlu0 %v422, 256
        %v425 = vpop.permute.xlu0 %424
        %v426 = vlaneseq
        %v427 = vshrl.u32 %v426, 7
        %v428 = vsub.s32 1, %v427
        %v429 = vrot.slane %v215, %v428
        %431 = vbcast.lane.b32.xlu0 %v429, 256
        %v432 = vpop.permute.xlu0 %431
        %v433 = vlaneseq
        %v434 = vshrl.u32 %v433, 7
        %v435 = vsub.s32 2, %v434
        %v436 = vrot.slane %v215, %v435
        %438 = vbcast.lane.b32.xlu0 %v436, 256
        %v439 = vpop.permute.xlu0 %438
        %v440 = vlaneseq
        %v441 = vshrl.u32 %v440, 7
        %v442 = vsub.s32 3, %v441
        %v443 = vrot.slane %v215, %v442
        %445 = vbcast.lane.b32.xlu0 %v443, 256
        %v446 = vpop.permute.xlu0 %445
        %v447 = vlaneseq
        %v448 = vshrl.u32 %v447, 7
        %v449 = vsub.s32 4, %v448
        %v450 = vrot.slane %v215, %v449
        %452 = vbcast.lane.b32.xlu0 %v450, 256
        %v453 = vpop.permute.xlu0 %452
        %v454 = vlaneseq
        %v455 = vshrl.u32 %v454, 7
        %v456 = vsub.s32 5, %v455
        %v457 = vrot.slane %v215, %v456
        %459 = vbcast.lane.b32.xlu0 %v457, 256
        %v460 = vpop.permute.xlu0 %459
        %v461 = vlaneseq
        %v462 = vshrl.u32 %v461, 7
        %v463 = vsub.s32 6, %v462
        %v464 = vrot.slane %v215, %v463
        %466 = vbcast.lane.b32.xlu0 %v464, 256
        %v467 = vpop.permute.xlu0 %466
        %v468 = vlaneseq
        %v469 = vshrl.u32 %v468, 7
        %v470 = vsub.s32 7, %v469
        %v471 = vrot.slane %v215, %v470
        %473 = vbcast.lane.b32.xlu0 %v471, 256
        %v474 = vpop.permute.xlu0 %473
        %v475 = vlaneseq
        %v476 = vshrl.u32 %v475, 7
        %v477 = vsub.s32 0, %v476
        %v478 = vrot.slane %v216, %v477
        %480 = vbcast.lane.b32.xlu0 %v478, 256
        %v481 = vpop.permute.xlu0 %480
        %v482 = vlaneseq
        %v483 = vshrl.u32 %v482, 7
        %v484 = vsub.s32 1, %v483
        %v485 = vrot.slane %v216, %v484
        %487 = vbcast.lane.b32.xlu0 %v485, 256
        %v488 = vpop.permute.xlu0 %487
        %v489 = vlaneseq
        %v490 = vshrl.u32 %v489, 7
        %v491 = vsub.s32 2, %v490
        %v492 = vrot.slane %v216, %v491
        %494 = vbcast.lane.b32.xlu0 %v492, 256
        %v495 = vpop.permute.xlu0 %494
        %v496 = vlaneseq
        %v497 = vshrl.u32 %v496, 7
        %v498 = vsub.s32 3, %v497
        %v499 = vrot.slane %v216, %v498
        %501 = vbcast.lane.b32.xlu0 %v499, 256
        %v502 = vpop.permute.xlu0 %501
        %v503 = vlaneseq
        %v504 = vshrl.u32 %v503, 7
        %v505 = vsub.s32 4, %v504
        %v506 = vrot.slane %v216, %v505
        %508 = vbcast.lane.b32.xlu0 %v506, 256
        %v509 = vpop.permute.xlu0 %508
        %v510 = vlaneseq
        %v511 = vshrl.u32 %v510, 7
        %v512 = vsub.s32 5, %v511
        %v513 = vrot.slane %v216, %v512
        %515 = vbcast.lane.b32.xlu0 %v513, 256
        %v516 = vpop.permute.xlu0 %515
        %v517 = vlaneseq
        %v518 = vshrl.u32 %v517, 7
        %v519 = vsub.s32 6, %v518
        %v520 = vrot.slane %v216, %v519
        %522 = vbcast.lane.b32.xlu0 %v520, 256
        %v523 = vpop.permute.xlu0 %522
        %v524 = vlaneseq
        %v525 = vshrl.u32 %v524, 7
        %v526 = vsub.s32 7, %v525
        %v527 = vrot.slane %v216, %v526
        %529 = vbcast.lane.b32.xlu0 %v527, 256
        %v530 = vpop.permute.xlu0 %529
        %v531 = vlaneseq
        %v532 = vshrl.u32 %v531, 7
        %v533 = vsub.s32 0, %v532
        %v534 = vrot.slane %v217, %v533
        %536 = vbcast.lane.b32.xlu0 %v534, 256
        %v537 = vpop.permute.xlu0 %536
        %v538 = vlaneseq
        %v539 = vshrl.u32 %v538, 7
        %v540 = vsub.s32 1, %v539
        %v541 = vrot.slane %v217, %v540
        %543 = vbcast.lane.b32.xlu0 %v541, 256
        %v544 = vpop.permute.xlu0 %543
        %v545 = vlaneseq
        %v546 = vshrl.u32 %v545, 7
        %v547 = vsub.s32 2, %v546
        %v548 = vrot.slane %v217, %v547
        %550 = vbcast.lane.b32.xlu0 %v548, 256
        %v551 = vpop.permute.xlu0 %550
        %v552 = vlaneseq
        %v553 = vshrl.u32 %v552, 7
        %v554 = vsub.s32 3, %v553
        %v555 = vrot.slane %v217, %v554
        %557 = vbcast.lane.b32.xlu0 %v555, 256
        %v558 = vpop.permute.xlu0 %557
        %v559 = vlaneseq
        %v560 = vshrl.u32 %v559, 7
        %v561 = vsub.s32 4, %v560
        %v562 = vrot.slane %v217, %v561
        %564 = vbcast.lane.b32.xlu0 %v562, 256
        %v565 = vpop.permute.xlu0 %564
        %v566 = vlaneseq
        %v567 = vshrl.u32 %v566, 7
        %v568 = vsub.s32 5, %v567
        %v569 = vrot.slane %v217, %v568
        %571 = vbcast.lane.b32.xlu0 %v569, 256
        %v572 = vpop.permute.xlu0 %571
        %v573 = vlaneseq
        %v574 = vshrl.u32 %v573, 7
        %v575 = vsub.s32 6, %v574
        %v576 = vrot.slane %v217, %v575
        %578 = vbcast.lane.b32.xlu0 %v576, 256
        %v579 = vpop.permute.xlu0 %578
        %v580 = vlaneseq
        %v581 = vshrl.u32 %v580, 7
        %v582 = vsub.s32 7, %v581
        %v583 = vrot.slane %v217, %v582
        %585 = vbcast.lane.b32.xlu0 %v583, 256
        %v586 = vpop.permute.xlu0 %585
        %v619 = vmul.f32 %v358, %v369
        %v620 = vmul.f32 %v358, %v376
        %v621 = vmul.f32 %v358, %v383
        %v622 = vmul.f32 %v358, %v390
        %v623 = vmul.f32 %v358, %v397
        %v624 = vmul.f32 %v358, %v404
        %v625 = vmul.f32 %v358, %v411
        %v626 = vmul.f32 %v358, %v418
        %v627 = vmul.f32 %v358, %v425
        %v628 = vmul.f32 %v358, %v432
        %v629 = vmul.f32 %v358, %v439
        %v630 = vmul.f32 %v358, %v446
        %v631 = vmul.f32 %v358, %v453
        %v632 = vmul.f32 %v358, %v460
        %v633 = vmul.f32 %v358, %v467
        %v634 = vmul.f32 %v358, %v474
        %v635 = vmul.f32 %v358, %v481
        %v636 = vmul.f32 %v358, %v488
        %v637 = vmul.f32 %v358, %v495
        %v638 = vmul.f32 %v358, %v502
        %v639 = vmul.f32 %v358, %v509
        %v640 = vmul.f32 %v358, %v516
        %v641 = vmul.f32 %v358, %v523
        %v642 = vmul.f32 %v358, %v530
        %v643 = vmul.f32 %v358, %v537
        %v644 = vmul.f32 %v358, %v544
        %v645 = vmul.f32 %v358, %v551
        %v646 = vmul.f32 %v358, %v558
        %v647 = vmul.f32 %v358, %v565
        %v648 = vmul.f32 %v358, %v572
        %v649 = vmul.f32 %v358, %v579
        %v650 = vmul.f32 %v358, %v586
        %683 = vset.pattern.permute.xlu0 0
        %684 = vperm.xlu0 %683, %v619
        %v685 = vpop.permute.xlu0 %684
        %686 = vset.pattern.permute.xlu0 0
        %687 = vperm.xlu0 %686, %v620
        %v688 = vpop.permute.xlu0 %687
        %689 = vset.pattern.permute.xlu0 0
        %690 = vperm.xlu0 %689, %v621
        %v691 = vpop.permute.xlu0 %690
        %692 = vset.pattern.permute.xlu0 0
        %693 = vperm.xlu0 %692, %v622
        %v694 = vpop.permute.xlu0 %693
        %695 = vset.pattern.permute.xlu0 0
        %696 = vperm.xlu0 %695, %v623
        %v697 = vpop.permute.xlu0 %696
        %698 = vset.pattern.permute.xlu0 0
        %699 = vperm.xlu0 %698, %v624
        %v700 = vpop.permute.xlu0 %699
        %701 = vset.pattern.permute.xlu0 0
        %702 = vperm.xlu0 %701, %v625
        %v703 = vpop.permute.xlu0 %702
        %704 = vset.pattern.permute.xlu0 0
        %705 = vperm.xlu0 %704, %v626
        %v706 = vpop.permute.xlu0 %705
        %707 = vset.pattern.permute.xlu0 0
        %708 = vperm.xlu0 %707, %v627
        %v709 = vpop.permute.xlu0 %708
        %710 = vset.pattern.permute.xlu0 0
        %711 = vperm.xlu0 %710, %v628
        %v712 = vpop.permute.xlu0 %711
        %713 = vset.pattern.permute.xlu0 0
        %714 = vperm.xlu0 %713, %v629
        %v715 = vpop.permute.xlu0 %714
        %716 = vset.pattern.permute.xlu0 0
        %717 = vperm.xlu0 %716, %v630
        %v718 = vpop.permute.xlu0 %717
        %719 = vset.pattern.permute.xlu0 0
        %720 = vperm.xlu0 %719, %v631
        %v721 = vpop.permute.xlu0 %720
        %722 = vset.pattern.permute.xlu0 0
        %723 = vperm.xlu0 %722, %v632
        %v724 = vpop.permute.xlu0 %723
        %725 = vset.pattern.permute.xlu0 0
        %726 = vperm.xlu0 %725, %v633
        %v727 = vpop.permute.xlu0 %726
        %728 = vset.pattern.permute.xlu0 0
        %729 = vperm.xlu0 %728, %v634
        %v730 = vpop.permute.xlu0 %729
        %731 = vset.pattern.permute.xlu0 0
        %732 = vperm.xlu0 %731, %v635
        %v733 = vpop.permute.xlu0 %732
        %734 = vset.pattern.permute.xlu0 0
        %735 = vperm.xlu0 %734, %v636
        %v736 = vpop.permute.xlu0 %735
        %737 = vset.pattern.permute.xlu0 0
        %738 = vperm.xlu0 %737, %v637
        %v739 = vpop.permute.xlu0 %738
        %740 = vset.pattern.permute.xlu0 0
        %741 = vperm.xlu0 %740, %v638
        %v742 = vpop.permute.xlu0 %741
        %743 = vset.pattern.permute.xlu0 0
        %744 = vperm.xlu0 %743, %v639
        %v745 = vpop.permute.xlu0 %744
        %746 = vset.pattern.permute.xlu0 0
        %747 = vperm.xlu0 %746, %v640
        %v748 = vpop.permute.xlu0 %747
        %749 = vset.pattern.permute.xlu0 0
        %750 = vperm.xlu0 %749, %v641
        %v751 = vpop.permute.xlu0 %750
        %752 = vset.pattern.permute.xlu0 0
        %753 = vperm.xlu0 %752, %v642
        %v754 = vpop.permute.xlu0 %753
        %755 = vset.pattern.permute.xlu0 0
        %756 = vperm.xlu0 %755, %v643
        %v757 = vpop.permute.xlu0 %756
        %758 = vset.pattern.permute.xlu0 0
        %759 = vperm.xlu0 %758, %v644
        %v760 = vpop.permute.xlu0 %759
        %761 = vset.pattern.permute.xlu0 0
        %762 = vperm.xlu0 %761, %v645
        %v763 = vpop.permute.xlu0 %762
        %764 = vset.pattern.permute.xlu0 0
        %765 = vperm.xlu0 %764, %v646
        %v766 = vpop.permute.xlu0 %765
        %767 = vset.pattern.permute.xlu0 0
        %768 = vperm.xlu0 %767, %v647
        %v769 = vpop.permute.xlu0 %768
        %770 = vset.pattern.permute.xlu0 0
        %771 = vperm.xlu0 %770, %v648
        %v772 = vpop.permute.xlu0 %771
        %773 = vset.pattern.permute.xlu0 0
        %774 = vperm.xlu0 %773, %v649
        %v775 = vpop.permute.xlu0 %774
        %776 = vset.pattern.permute.xlu0 0
        %777 = vperm.xlu0 %776, %v650
        %v778 = vpop.permute.xlu0 %777
        %v779 = vlaneseq
        %v780 = vshrl.u32 %v779, 7
        %v781 = vsub.s32 %v306, %v780
        %v782 = vrot.slane %v685, %v781
        %v783 = vlaneseq
        %v784 = vshrl.u32 %v783, 7
        %v785 = vsub.s32 %v306, %v784
        %v786 = vrot.slane %v688, %v785
        %v787 = vlaneseq
        %v788 = vshrl.u32 %v787, 7
        %v789 = vsub.s32 %v306, %v788
        %v790 = vrot.slane %v691, %v789
        %v791 = vlaneseq
        %v792 = vshrl.u32 %v791, 7
        %v793 = vsub.s32 %v306, %v792
        %v794 = vrot.slane %v694, %v793
        %v795 = vlaneseq
        %v796 = vshrl.u32 %v795, 7
        %v797 = vsub.s32 %v306, %v796
        %v798 = vrot.slane %v697, %v797
        %v799 = vlaneseq
        %v800 = vshrl.u32 %v799, 7
        %v801 = vsub.s32 %v306, %v800
        %v802 = vrot.slane %v700, %v801
        %v803 = vlaneseq
        %v804 = vshrl.u32 %v803, 7
        %v805 = vsub.s32 %v306, %v804
        %v806 = vrot.slane %v703, %v805
        %v807 = vlaneseq
        %v808 = vshrl.u32 %v807, 7
        %v809 = vsub.s32 %v306, %v808
        %v810 = vrot.slane %v706, %v809
        %v811 = vlaneseq
        %v812 = vshrl.u32 %v811, 7
        %v813 = vsub.s32 %v306, %v812
        %v814 = vrot.slane %v709, %v813
        %v815 = vlaneseq
        %v816 = vshrl.u32 %v815, 7
        %v817 = vsub.s32 %v306, %v816
        %v818 = vrot.slane %v712, %v817
        %v819 = vlaneseq
        %v820 = vshrl.u32 %v819, 7
        %v821 = vsub.s32 %v306, %v820
        %v822 = vrot.slane %v715, %v821
        %v823 = vlaneseq
        %v824 = vshrl.u32 %v823, 7
        %v825 = vsub.s32 %v306, %v824
        %v826 = vrot.slane %v718, %v825
        %v827 = vlaneseq
        %v828 = vshrl.u32 %v827, 7
        %v829 = vsub.s32 %v306, %v828
        %v830 = vrot.slane %v721, %v829
        %v831 = vlaneseq
        %v832 = vshrl.u32 %v831, 7
        %v833 = vsub.s32 %v306, %v832
        %v834 = vrot.slane %v724, %v833
        %v835 = vlaneseq
        %v836 = vshrl.u32 %v835, 7
        %v837 = vsub.s32 %v306, %v836
        %v838 = vrot.slane %v727, %v837
        %v839 = vlaneseq
        %v840 = vshrl.u32 %v839, 7
        %v841 = vsub.s32 %v306, %v840
        %v842 = vrot.slane %v730, %v841
        %v843 = vlaneseq
        %v844 = vshrl.u32 %v843, 7
        %v845 = vsub.s32 %v306, %v844
        %v846 = vrot.slane %v733, %v845
        %v847 = vlaneseq
        %v848 = vshrl.u32 %v847, 7
        %v849 = vsub.s32 %v306, %v848
        %v850 = vrot.slane %v736, %v849
        %v851 = vlaneseq
        %v852 = vshrl.u32 %v851, 7
        %v853 = vsub.s32 %v306, %v852
        %v854 = vrot.slane %v739, %v853
        %v855 = vlaneseq
        %v856 = vshrl.u32 %v855, 7
        %v857 = vsub.s32 %v306, %v856
        %v858 = vrot.slane %v742, %v857
        %v859 = vlaneseq
        %v860 = vshrl.u32 %v859, 7
        %v861 = vsub.s32 %v306, %v860
        %v862 = vrot.slane %v745, %v861
        %v863 = vlaneseq
        %v864 = vshrl.u32 %v863, 7
        %v865 = vsub.s32 %v306, %v864
        %v866 = vrot.slane %v748, %v865
        %v867 = vlaneseq
        %v868 = vshrl.u32 %v867, 7
        %v869 = vsub.s32 %v306, %v868
        %v870 = vrot.slane %v751, %v869
        %v871 = vlaneseq
        %v872 = vshrl.u32 %v871, 7
        %v873 = vsub.s32 %v306, %v872
        %v874 = vrot.slane %v754, %v873
        %v875 = vlaneseq
        %v876 = vshrl.u32 %v875, 7
        %v877 = vsub.s32 %v306, %v876
        %v878 = vrot.slane %v757, %v877
        %v879 = vlaneseq
        %v880 = vshrl.u32 %v879, 7
        %v881 = vsub.s32 %v306, %v880
        %v882 = vrot.slane %v760, %v881
        %v883 = vlaneseq
        %v884 = vshrl.u32 %v883, 7
        %v885 = vsub.s32 %v306, %v884
        %v886 = vrot.slane %v763, %v885
        %v887 = vlaneseq
        %v888 = vshrl.u32 %v887, 7
        %v889 = vsub.s32 %v306, %v888
        %v890 = vrot.slane %v766, %v889
        %v891 = vlaneseq
        %v892 = vshrl.u32 %v891, 7
        %v893 = vsub.s32 %v306, %v892
        %v894 = vrot.slane %v769, %v893
        %v895 = vlaneseq
        %v896 = vshrl.u32 %v895, 7
        %v897 = vsub.s32 %v306, %v896
        %v898 = vrot.slane %v772, %v897
        %v899 = vlaneseq
        %v900 = vshrl.u32 %v899, 7
        %v901 = vsub.s32 %v306, %v900
        %v902 = vrot.slane %v775, %v901
        %v903 = vlaneseq
        %v904 = vshrl.u32 %v903, 7
        %v905 = vsub.s32 %v306, %v904
        %v906 = vrot.slane %v778, %v905
        %v907 = vsel %vm351, %v786, %v782
        %vm908 = vcmask 1042434
        %v909 = vsel %vm908, %v790, %v907
        %vm910 = vcmask 1043459
        %v911 = vsel %vm910, %v794, %v909
        %vm912 = vcmask 1044484
        %v913 = vsel %vm912, %v798, %v911
        %vm914 = vcmask 1045509
        %v915 = vsel %vm914, %v802, %v913
        %vm916 = vcmask 1046534
        %v917 = vsel %vm916, %v806, %v915
        %vm918 = vcmask 1047559
        %v919 = vsel %vm918, %v810, %v917
        %v920 = vsel %vm351, %v818, %v814
        %v921 = vsel %vm908, %v822, %v920
        %v922 = vsel %vm910, %v826, %v921
        %v923 = vsel %vm912, %v830, %v922
        %v924 = vsel %vm914, %v834, %v923
        %v925 = vsel %vm916, %v838, %v924
        %v926 = vsel %vm918, %v842, %v925
        %v927 = vsel %vm351, %v850, %v846
        %v928 = vsel %vm908, %v854, %v927
        %v929 = vsel %vm910, %v858, %v928
        %v930 = vsel %vm912, %v862, %v929
        %v931 = vsel %vm914, %v866, %v930
        %v932 = vsel %vm916, %v870, %v931
        %v933 = vsel %vm918, %v874, %v932
        %v934 = vsel %vm351, %v882, %v878
        %v935 = vsel %vm908, %v886, %v934
        %v936 = vsel %vm910, %v890, %v935
        %v937 = vsel %vm912, %v894, %v936
        %v938 = vsel %vm914, %v898, %v937
        %v939 = vsel %vm916, %v902, %v938
        %v940 = vsel %vm918, %v906, %v939
        %vm945 = vcmask 15360
        %v946 = vsel %vm945, %v919, 0.0
        %947 = vadd.xlane.f32.xlu0 %v946
        %v948 = vpop.xlane.xlu0 %947
        %v949 = vsel %vm945, %v926, 0.0
        %950 = vadd.xlane.f32.xlu0 %v949
        %v951 = vpop.xlane.xlu0 %950
        %v952 = vsel %vm945, %v933, 0.0
        %953 = vadd.xlane.f32.xlu0 %v952
        %v954 = vpop.xlane.xlu0 %953
        %v955 = vsel %vm945, %v940, 0.0
        %956 = vadd.xlane.f32.xlu0 %v955
        %v957 = vpop.xlane.xlu0 %956
        %v958 = vxor.u32 %v948, 2147483648
        %v959 = vxor.u32 %v951, 2147483648
        %v960 = vxor.u32 %v954, 2147483648
        %v961 = vxor.u32 %v957, 2147483648
        %v962 = vmul.f32 %v958, 1.442695
        %v963 = vpow.pop %v962
        %v964 = vmul.f32 %v959, 1.442695
        %v965 = vpow.pop %v964
        %v966 = vmul.f32 %v960, 1.442695
        %v967 = vpow.pop %v966
        %v968 = vmul.f32 %v961, 1.442695
        %v969 = vpow.pop %v968
        %v970 = vadd.f32 %v963, 1.0
        %v971 = vadd.f32 %v965, 1.0
        %v972 = vadd.f32 %v967, 1.0
        %v973 = vadd.f32 %v969, 1.0
        %v974 = vrcp.pop %v970
        %v975 = vmul.f32 1.0, %v974
        %v976 = vrcp.pop %v971
        %v977 = vmul.f32 1.0, %v976
        %v978 = vrcp.pop %v972
        %v979 = vmul.f32 1.0, %v978
        %v980 = vrcp.pop %v973
        %v981 = vmul.f32 1.0, %v980
        %v982 = vmul.f32 %v189, %v975
        %v983 = vmul.f32 %v190, %v975
        %v984 = vmul.f32 %v191, %v977
        %v985 = vmul.f32 %v192, %v977
        %v986 = vmul.f32 %v193, %v979
        %v987 = vmul.f32 %v194, %v979
        %v988 = vmul.f32 %v195, %v981
        %v989 = vmul.f32 %v196, %v981
        %990 = vst [vmem:[%s188] sm:$0xff] %v982
        %991 = vst [vmem:[%s188 + $0x8] sm:$0xff] %v983
        %992 = vst [vmem:[%s188 + $0x10] sm:$0xff] %v984
        %993 = vst [vmem:[%s188 + $0x18] sm:$0xff] %v985
        %994 = vst [vmem:[%s188 + $0x20] sm:$0xff] %v986
        %995 = vst [vmem:[%s188 + $0x28] sm:$0xff] %v987
        %996 = vst [vmem:[%s188 + $0x30] sm:$0xff] %v988
        %997 = vst [vmem:[%s188 + $0x38] sm:$0xff] %v989
        %s998 = sand.u32 %s96, 1
        %s999 = scalar_lea.sflag [#allocation4], %s998
        %s1000 = sand.u32 %s96, 1
        %s1001 = smul.addr %s1000, 64
        %s1002 = scalar_lea.vmem [#allocation5], %s1001
        // Predicated region
        $region37: #{tpu_custom_call.1} parent=31 // pred_check
          %p1003 = pneg %p106
        $region38: #{tpu_custom_call.1} parent=31 // pred_check_branch
          %1005 = sbr.rel (%p1003) target = $region40
        $region39: #{tpu_custom_call.1} parent=31 // pred_region
          %s1007 = ssub.s32 1024, 1024
          %1008 = vsyncadd %s999, %s1007
          %s1009 = smul.addr %s20, 8
          %s1010 = smul.addr %s1009, 128
          %s1011 = scalar_lea.hbm %s3, %s1010
          %s1012 = sshll.u32 %s1002, 4
          %s1013 = int_to_ptr.vmem [resolvable:$true] %s1012
          %1018 = dma.vmem_to_hbm [thread:$0]  %s1013, 1024, %s1011, %s999, 256, 256, 16
        $region40: #{tpu_custom_call.1} parent=31 // pred_fallthru
          _
      $region32: #{tpu_custom_call.1} parent=5 // pred_fallthru
        _
      %p1019 = scmp.le.s32.totalorder 2, %s15
      // Predicated region
      $region41: #{tpu_custom_call.1} parent=5 // pred_check
        %p1020 = pneg %p1019
      $region42: #{tpu_custom_call.1} parent=5 // pred_check_branch
        %1022 = sbr.rel (%p1020) target = $region44
      $region43: #{tpu_custom_call.1} parent=5 // pred_region
        %s1023 = ssub.s32 %s15, 2
        // Predicated region
        $region45: #{tpu_custom_call.1} parent=43 // pred_check
          %p1024 = pneg %p112
        $region46: #{tpu_custom_call.1} parent=43 // pred_check_branch
          %1026 = sbr.rel (%p1024) target = $region48
        $region47: #{tpu_custom_call.1} parent=43 // pred_region
          %s1027 = sand.u32 %s97, 1
          %s1028 = scalar_lea.sflag [#allocation4], %s1027
          %s1029 = sand.u32 %s97, 1
          %s1030 = smul.addr %s1029, 64
          %s1031 = scalar_lea.vmem [#allocation5], %s1030
          %1032 = dma.done %s1028, 1024
        $region48: #{tpu_custom_call.1} parent=43 // pred_fallthru
          _
      $region44: #{tpu_custom_call.1} parent=5 // pred_fallthru
        _
    $region6: #{tpu_custom_call.1} parent=1 // loop_footer
      %s19 = sadd.s32 1, %s15
    $region7: #{tpu_custom_call.1} parent=1 // loop_footer_branch
      %14 = sbr.rel target = $region3
    $region8: #{tpu_custom_call.1} parent=1 // loop_exit
      _
    %1033 = vsyncpa [#allocation3], 1
    %s1034 = scalar_lea.sflag [#allocation3], 1
    %1035 = vsyncpa %s1034, 1
    %1036 = vsyncpa [#allocation4], 1
    %s1037 = scalar_lea.sflag [#allocation4], 1
    %1038 = vsyncpa %s1037, 1

</llo_original>
